<compile_context>
chip_gen: v7x
topology: tpu7x:2x2x1
jax: 0.10.0
libtpu: 0.0.40
codegen_flags: <defaults>
</compile_context>

<pallas_src>
import functools

import jax
import jax.numpy as jnp
from jax.experimental import pallas as pl
from jax.experimental.pallas import tpu as pltpu


# ----------------------------------------------------------------------------
# Stage 1: streaming per-class partial sums (tp, sum(y_pred), sum(y_true)).
# Grid = (num_splits, steps_per_split); splits map to TensorCores on v7x.
# ----------------------------------------------------------------------------
def _macro_f1_partials_kernel(pred_ref, true_ref, tp_out, sp_out, st_out,
                              tp_acc, sp_acc, st_acc, *,
                              n_rows, num_classes, tile_rows, steps_per_split,
                              total_tiles, apply_softmax, labels_are_int,
                              has_phantom):
    t = pl.program_id(1)
    gt = pl.program_id(0) * steps_per_split + t       # global batch-tile index

    @pl.when(t == 0)
    def _init():
        tp_acc[...] = jnp.zeros_like(tp_acc)
        sp_acc[...] = jnp.zeros_like(sp_acc)
        st_acc[...] = jnp.zeros_like(st_acc)

    def accumulate(mask_rows):
        x = pred_ref[...].astype(jnp.float32)          # (TN, C)
        if labels_are_int:
            # Build the one-hot in-kernel: labels are a (TN, 1) int32 block.
            cls = jax.lax.broadcasted_iota(jnp.int32, (tile_rows, num_classes), 1)
            y_true = (cls == true_ref[...]).astype(jnp.float32)
        else:
            y_true = true_ref[...].astype(jnp.float32)

        if apply_softmax:
            # Numerically stable softmax along the class (lane) axis.
            m = jnp.max(x, axis=-1, keepdims=True)
            e = jnp.exp(x - m)
            y_pred = e / jnp.sum(e, axis=-1, keepdims=True)   # exact reciprocal
        else:
            y_pred = x

        if mask_rows:
            # Zero batch-padding rows of the boundary tile. jnp.where is a
            # select, so garbage/NaN in padded rows cannot leak.
            row = gt * tile_rows + jax.lax.broadcasted_iota(
                jnp.int32, (tile_rows, 1), 0)
            valid = row < n_rows
            y_pred = jnp.where(valid, y_pred, 0.0)
            y_true = jnp.where(valid, y_true, 0.0)

        # Per-class partial sums over the batch axis; fp/fn are recovered
        # algebraically in the epilogue (fp = sum(y_pred)-tp, fn = sum(y_true)-tp).
        tp_acc[...] += jnp.sum(y_true * y_pred, axis=0, keepdims=True)
        sp_acc[...] += jnp.sum(y_pred, axis=0, keepdims=True)
        st_acc[...] += jnp.sum(y_true, axis=0, keepdims=True)

    last_tile = total_tiles - 1
    needs_row_mask = (n_rows % tile_rows) != 0
    if needs_row_mask:
        # Mask only on the boundary tile; steady-state tiles stay unmasked.
        # Phantom steps (gt > last_tile) of an uneven split fall through both.
        @pl.when(gt < last_tile)
        def _steady():
            accumulate(mask_rows=False)

        @pl.when(gt == last_tile)
        def _boundary():
            accumulate(mask_rows=True)
    elif has_phantom:
        @pl.when(gt <= last_tile)
        def _guarded():
            accumulate(mask_rows=False)
    else:
        accumulate(mask_rows=False)

    @pl.when(t == pl.num_programs(1) - 1)
    def _finalize():
        tp_out[...] = tp_acc[...].reshape(tp_out.shape)
        sp_out[...] = sp_acc[...].reshape(sp_out.shape)
        st_out[...] = st_acc[...].reshape(st_out.shape)


# ----------------------------------------------------------------------------
# Stage 2: combine per-split partials and finish the (tiny) F1 math.
# ----------------------------------------------------------------------------
def _f1_epilogue_kernel(tp_ref, sp_ref, st_ref, out_ref, *, num_classes):
    tp = jnp.sum(tp_ref[...], axis=0)        # (1, C)
    sp = jnp.sum(sp_ref[...], axis=0)        # per-class sum(y_pred)
    st = jnp.sum(st_ref[...], axis=0)        # per-class sum(y_true)
    eps = jnp.float32(1e-8)
    fp = sp - tp
    fn = st - tp
    p = tp / (tp + fp + eps)
    r = tp / (tp + fn + eps)
    f1 = 2.0 * p * r / (p + r + eps)
    loss = 1.0 - jnp.sum(f1) / jnp.float32(num_classes)   # mean over classes
    out_ref[...] = jnp.full((1, 1), loss, dtype=out_ref.dtype)


# ----------------------------------------------------------------------------
# Generation-aware tiling plan.
# ----------------------------------------------------------------------------
def _vmem_capacity_bytes():
    try:
        info = pltpu.get_tpu_info()
    except Exception:
        return 64 << 20
    # Try known field spellings; fall back conservatively (v7x size) so we
    # never over-commit VMEM on an unknown part.
    for name in ("vmem_capacity_bytes", "vmem_size_bytes", "vmem_bytes"):
        v = getattr(info, name, None)
        if v:
            return int(v)
    return 64 << 20


def _vmem_plan(C, pred_dtype, label_cols, label_dtype):
    """Pick batch-tile rows + scoped VMEM limit for the current TPU generation."""
    vmem = _vmem_capacity_bytes()
    pad = lambda c: ((c + 127) // 128) * 128            # lane padding (minor dim)
    row_vmem = (pad(C) * jnp.dtype(pred_dtype).itemsize
                + pad(label_cols) * jnp.dtype(label_dtype).itemsize)
    # Double-buffered input-stream budget: ~60% of physical VMEM, capped at
    # 40 MiB (targets >= 2-4 MB of HBM per grid step; keeps v7x headroom).
    budget = min((vmem * 3) // 5, 40 << 20)
    tn = budget // (2 * row_vmem)                        # x2 pipeline buffers
    tn = max(16, (tn // 16) * 16)                        # bf16 sublane tile (16,128)
    vmem_limit = int(min(budget + (8 << 20), (vmem * 3) // 4))
    return int(tn), vmem_limit


# ----------------------------------------------------------------------------
# Wrapper.
# ----------------------------------------------------------------------------
def macro_f1_loss(y_pred, y_true, from_logits=True, tile_rows=None,
                  num_splits=None):
    """Macro-F1 loss (1 - mean_c F1_c).

    y_pred: (N, C) logits (or probabilities if from_logits=False).
    y_true: (N, C) dense targets (one-hot / soft / multi-label, as in the
            PyTorch module), OR (N,)/(N,1) integer class ids (fast path:
            4 B/row HBM, one-hot built in-kernel).
    """
    assert y_pred.ndim == 2
    N, C = y_pred.shape

    labels_are_int = jnp.issubdtype(y_true.dtype, jnp.integer)
    if labels_are_int:
        y_true = y_true.reshape(N, 1).astype(jnp.int32)
    else:
        assert y_true.shape == (N, C)
    lbl_cols = y_true.shape[1]

    auto_tn, vmem_limit = _vmem_plan(C, y_pred.dtype, lbl_cols, y_true.dtype)
    tn = tile_rows if tile_rows is not None else auto_tn
    if tn >= N:
        tn = N                                   # single full-extent block
    else:
        tn = max(16, (tn // 16) * 16)            # sublane-tile multiple when tn < N
    total_tiles = pl.cdiv(N, tn)

    # Batch split across TensorCores (v7x has 2 TCs; harmless serial loop on
    # single-core v5e/v6e).
    if num_splits is None:
        num_splits = 2 if total_tiles >= 2 else 1
    num_splits = max(1, min(num_splits, total_tiles))
    steps = pl.cdiv(total_tiles, num_splits)             # grid steps per split
    has_phantom = num_splits * steps > total_tiles

    if has_phantom:
        # Clamp phantom steps to the last real tile (in-bounds DMA); the
        # kernel skips their accumulation via pl.when.
        def tile_idx(s, t):
            return jnp.minimum(s * steps + t, total_tiles - 1)
    else:
        def tile_idx(s, t):
            return s * steps + t

    pred_spec = pl.BlockSpec((tn, C), lambda s, t: (tile_idx(s, t), 0))
    true_spec = pl.BlockSpec((tn, lbl_cols), lambda s, t: (tile_idx(s, t), 0))
    part_spec = pl.BlockSpec((1, 1, C), lambda s, t: (s, 0, 0))
    part_shape = jax.ShapeDtypeStruct((num_splits, 1, C), jnp.float32)

    kernel = functools.partial(
        _macro_f1_partials_kernel,
        n_rows=N,
        num_classes=C,
        tile_rows=tn,
        steps_per_split=steps,
        total_tiles=total_tiles,
        apply_softmax=from_logits,
        labels_are_int=labels_are_int,
        has_phantom=has_phantom,
    )

    tp_p, sp_p, st_p = pl.pallas_call(
        kernel,
        out_shape=(part_shape, part_shape, part_shape),
        grid_spec=pltpu.PrefetchScalarGridSpec(
            num_scalar_prefetch=0,
            grid=(num_splits, steps),
            in_specs=[pred_spec, true_spec],
            out_specs=(part_spec, part_spec, part_spec),
            scratch_shapes=[pltpu.VMEM((1, C), jnp.float32)] * 3,
        ),
        compiler_params=pltpu.CompilerParams(
            # split axis -> cores; step axis carries the accumulators
            dimension_semantics=("parallel", "arbitrary"),
            vmem_limit_bytes=vmem_limit,
        ),
    )(y_pred, y_true)

    out = pl.pallas_call(
        functools.partial(_f1_epilogue_kernel, num_classes=C),
        out_shape=jax.ShapeDtypeStruct((1, 1), jnp.float32),
        grid=(1,),
        in_specs=[pl.BlockSpec((num_splits, 1, C), lambda i: (0, 0, 0))] * 3,
        out_specs=pl.BlockSpec((1, 1), lambda i: (0, 0)),
    )(tp_p, sp_p, st_p)
    return out[0, 0]


# ----------------------------------------------------------------------------
# Pure-JAX reference (mirrors the PyTorch module).
# ----------------------------------------------------------------------------
def _macro_f1_ref(y_pred, y_true):
    y_pred = jax.nn.softmax(y_pred.astype(jnp.float32), axis=1)
    y_true = y_true.astype(jnp.float32)
    tp = jnp.sum(y_true * y_pred, axis=0)
    fp = jnp.sum((1 - y_true) * y_pred, axis=0)
    fn = jnp.sum(y_true * (1 - y_pred), axis=0)
    p = tp / (tp + fp + 1e-8)
    r = tp / (tp + fn + 1e-8)
    f1 = 2 * p * r / (p + r + 1e-8)
    return 1 - jnp.mean(f1)


if __name__ == "__main__":
    key = jax.random.PRNGKey(0)
    k1, k2 = jax.random.split(key)

    N, C = 72, 32
    y_pred = jax.random.normal(k1, (N, C), dtype=jnp.float32)           # logits
    labels = jax.random.randint(k2, (N,), 0, C, dtype=jnp.int32)
    y_true_dense = jax.nn.one_hot(labels, C, dtype=jnp.bfloat16)        # exact 0/1

    ref = _macro_f1_ref(y_pred, y_true_dense)

    # 1) auto (generation-sized) tiling: collapses to one tile, one split,
    #    integer-label fast path.
    loss_int = jax.block_until_ready(macro_f1_loss(y_pred, labels))
    # 2) forced small tiles: 5 tiles -> 2 core-splits + one phantom step +
    #    boundary-row masking; dense bf16 one-hot label path.
    loss_dense = jax.block_until_ready(
        macro_f1_loss(y_pred, y_true_dense, tile_rows=16))
    # 3) same forced tiling with the integer-label path.
    loss_int_tiled = jax.block_until_ready(
        macro_f1_loss(y_pred, labels, tile_rows=16))

    for got in (loss_int, loss_dense, loss_int_tiled):
        assert jnp.allclose(got, ref, atol=1e-5, rtol=0), (got, ref)

    print("KERNEL_OK")
</pallas_src>

<mosaic_0001>
module attributes {stable_mosaic.version = 11 : i64} {
  func.func @_macro_f1_partials_kernel(%arg0: i32, %arg1: i32, %arg2: memref<72x32xf32, #tpu.memory_space<vmem>>, %arg3: memref<72x1xi32, #tpu.memory_space<vmem>>, %arg4: memref<1x1x32xf32, #tpu.memory_space<vmem>>, %arg5: memref<1x1x32xf32, #tpu.memory_space<vmem>>, %arg6: memref<1x1x32xf32, #tpu.memory_space<vmem>>, %arg7: memref<1x32xf32, #tpu.memory_space<vmem>>, %arg8: memref<1x32xf32, #tpu.memory_space<vmem>>, %arg9: memref<1x32xf32, #tpu.memory_space<vmem>>) attributes {dimension_semantics = [#tpu.dimension_semantics<parallel>, #tpu.dimension_semantics<arbitrary>], iteration_bounds = array<i64: 1, 1>, scalar_prefetch = 0 : i64, scratch_operands = 3 : i64, tpu.core_type = #tpu.core_type<tc>, window_params = [{transform_indices = @transform_0, window_bounds = array<i64: 72, 32>}, {transform_indices = @transform_1, window_bounds = array<i64: 72, 1>}, {transform_indices = @transform_2, window_bounds = array<i64: 1, 1, 32>}, {transform_indices = @transform_3, window_bounds = array<i64: 1, 1, 32>}, {transform_indices = @transform_4, window_bounds = array<i64: 1, 1, 32>}]} {
    %c0_i32 = arith.constant 0 : i32
    %0 = arith.cmpi eq, %arg1, %c0_i32 : i32
    %1 = arith.extui %0 : i1 to i32
    %c0_i32_0 = arith.constant 0 : i32
    %2 = arith.cmpi ne, %1, %c0_i32_0 : i32
    scf.if %2 {
      %cst_22 = arith.constant 0.000000e+00 : f32
      %38 = vector.broadcast %cst_22 : f32 to vector<1x32xf32>
      %c0_23 = arith.constant 0 : index
      %c0_24 = arith.constant 0 : index
      %39 = vector.load %arg7[%c0_23, %c0_24] : memref<1x32xf32, #tpu.memory_space<vmem>>, vector<1x32xf32>
      tpu.vector_store %arg7[%c0_23, %c0_24], %38 {strides = array<i32>} : memref<1x32xf32, #tpu.memory_space<vmem>>, vector<1x32xf32>,
      %cst_25 = arith.constant 0.000000e+00 : f32
      %40 = vector.broadcast %cst_25 : f32 to vector<1x32xf32>
      %c0_26 = arith.constant 0 : index
      %c0_27 = arith.constant 0 : index
      %41 = vector.load %arg8[%c0_26, %c0_27] : memref<1x32xf32, #tpu.memory_space<vmem>>, vector<1x32xf32>
      tpu.vector_store %arg8[%c0_26, %c0_27], %40 {strides = array<i32>} : memref<1x32xf32, #tpu.memory_space<vmem>>, vector<1x32xf32>,
      %cst_28 = arith.constant 0.000000e+00 : f32
      %42 = vector.broadcast %cst_28 : f32 to vector<1x32xf32>
      %c0_29 = arith.constant 0 : index
      %c0_30 = arith.constant 0 : index
      %43 = vector.load %arg9[%c0_29, %c0_30] : memref<1x32xf32, #tpu.memory_space<vmem>>, vector<1x32xf32>
      tpu.vector_store %arg9[%c0_29, %c0_30], %42 {strides = array<i32>} : memref<1x32xf32, #tpu.memory_space<vmem>>, vector<1x32xf32>,
    } else {
    }
    %c0 = arith.constant 0 : index
    %c0_1 = arith.constant 0 : index
    %3 = vector.load %arg2[%c0, %c0_1] : memref<72x32xf32, #tpu.memory_space<vmem>>, vector<72x32xf32>
    %4 = tpu.iota {dimensions = array<i32: 1>} : vector<72x32xi32>
    %c0_2 = arith.constant 0 : index
    %c0_3 = arith.constant 0 : index
    %5 = vector.load %arg3[%c0_2, %c0_3] : memref<72x1xi32, #tpu.memory_space<vmem>>, vector<72x1xi32>
    %6 = vector.broadcast %5 : vector<72x1xi32> to vector<72x32xi32>
    %7 = arith.cmpi eq, %4, %6 : vector<72x32xi32>
    %8 = arith.extui %7 : vector<72x32xi1> to vector<72x32xi32>
    %9 = arith.sitofp %8 : vector<72x32xi32> to vector<72x32xf32>
    %cst = arith.constant dense<0xFF800000> : vector<72xf32>
    %10 = vector.multi_reduction <maximumf>, %3, %cst [1] : vector<72x32xf32> to vector<72xf32>
    %11 = vector.shape_cast %10 : vector<72xf32> to vector<72x1xf32>
    %12 = vector.broadcast %11 : vector<72x1xf32> to vector<72x32xf32>
    %13 = arith.subf %3, %12 : vector<72x32xf32>
    %14 = math.exp %13 : vector<72x32xf32>
    %cst_4 = arith.constant dense<0.000000e+00> : vector<72xf32>
    %15 = vector.multi_reduction <add>, %14, %cst_4 [1] : vector<72x32xf32> to vector<72xf32>
    %16 = vector.shape_cast %15 : vector<72xf32> to vector<72x1xf32>
    %17 = vector.broadcast %16 : vector<72x1xf32> to vector<72x32xf32>
    %18 = arith.divf %14, %17 : vector<72x32xf32>
    %c0_5 = arith.constant 0 : index
    %c0_6 = arith.constant 0 : index
    %19 = vector.load %arg7[%c0_5, %c0_6] : memref<1x32xf32, #tpu.memory_space<vmem>>, vector<1x32xf32>
    %20 = arith.mulf %9, %18 : vector<72x32xf32>
    %cst_7 = arith.constant dense<0.000000e+00> : vector<32xf32>
    %21 = vector.multi_reduction <add>, %20, %cst_7 [0] : vector<72x32xf32> to vector<32xf32>
    %22 = vector.shape_cast %21 : vector<32xf32> to vector<1x32xf32>
    %23 = arith.addf %19, %22 : vector<1x32xf32>
    %c0_8 = arith.constant 0 : index
    %c0_9 = arith.constant 0 : index
    %24 = vector.load %arg7[%c0_8, %c0_9] : memref<1x32xf32, #tpu.memory_space<vmem>>, vector<1x32xf32>
    tpu.vector_store %arg7[%c0_8, %c0_9], %23 {strides = array<i32>} : memref<1x32xf32, #tpu.memory_space<vmem>>, vector<1x32xf32>,
    %c0_10 = arith.constant 0 : index
    %c0_11 = arith.constant 0 : index
    %25 = vector.load %arg8[%c0_10, %c0_11] : memref<1x32xf32, #tpu.memory_space<vmem>>, vector<1x32xf32>
    %cst_12 = arith.constant dense<0.000000e+00> : vector<32xf32>
    %26 = vector.multi_reduction <add>, %18, %cst_12 [0] : vector<72x32xf32> to vector<32xf32>
    %27 = vector.shape_cast %26 : vector<32xf32> to vector<1x32xf32>
    %28 = arith.addf %25, %27 : vector<1x32xf32>
    %c0_13 = arith.constant 0 : index
    %c0_14 = arith.constant 0 : index
    %29 = vector.load %arg8[%c0_13, %c0_14] : memref<1x32xf32, #tpu.memory_space<vmem>>, vector<1x32xf32>
    tpu.vector_store %arg8[%c0_13, %c0_14], %28 {strides = array<i32>} : memref<1x32xf32, #tpu.memory_space<vmem>>, vector<1x32xf32>,
    %c0_15 = arith.constant 0 : index
    %c0_16 = arith.constant 0 : index
    %30 = vector.load %arg9[%c0_15, %c0_16] : memref<1x32xf32, #tpu.memory_space<vmem>>, vector<1x32xf32>
    %cst_17 = arith.constant dense<0.000000e+00> : vector<32xf32>
    %31 = vector.multi_reduction <add>, %9, %cst_17 [0] : vector<72x32xf32> to vector<32xf32>
    %32 = vector.shape_cast %31 : vector<32xf32> to vector<1x32xf32>
    %33 = arith.addf %30, %32 : vector<1x32xf32>
    %c0_18 = arith.constant 0 : index
    %c0_19 = arith.constant 0 : index
    %34 = vector.load %arg9[%c0_18, %c0_19] : memref<1x32xf32, #tpu.memory_space<vmem>>, vector<1x32xf32>
    tpu.vector_store %arg9[%c0_18, %c0_19], %33 {strides = array<i32>} : memref<1x32xf32, #tpu.memory_space<vmem>>, vector<1x32xf32>,
    %c0_i32_20 = arith.constant 0 : i32
    %35 = arith.cmpi eq, %arg1, %c0_i32_20 : i32
    %36 = arith.extui %35 : i1 to i32
    %c0_i32_21 = arith.constant 0 : i32
    %37 = arith.cmpi ne, %36, %c0_i32_21 : i32
    scf.if %37 {
      %c0_22 = arith.constant 0 : index
      %c0_23 = arith.constant 0 : index
      %38 = vector.load %arg7[%c0_22, %c0_23] : memref<1x32xf32, #tpu.memory_space<vmem>>, vector<1x32xf32>
      %39 = vector.shape_cast %38 : vector<1x32xf32> to vector<1x1x32xf32>
      %c0_24 = arith.constant 0 : index
      %c0_25 = arith.constant 0 : index
      %c0_26 = arith.constant 0 : index
      %40 = vector.load %arg4[%c0_24, %c0_25, %c0_26] : memref<1x1x32xf32, #tpu.memory_space<vmem>>, vector<1x1x32xf32>
      tpu.vector_store %arg4[%c0_24, %c0_25, %c0_26], %39 {strides = array<i32>} : memref<1x1x32xf32, #tpu.memory_space<vmem>>, vector<1x1x32xf32>,
      %c0_27 = arith.constant 0 : index
      %c0_28 = arith.constant 0 : index
      %41 = vector.load %arg8[%c0_27, %c0_28] : memref<1x32xf32, #tpu.memory_space<vmem>>, vector<1x32xf32>
      %42 = vector.shape_cast %41 : vector<1x32xf32> to vector<1x1x32xf32>
      %c0_29 = arith.constant 0 : index
      %c0_30 = arith.constant 0 : index
      %c0_31 = arith.constant 0 : index
      %43 = vector.load %arg5[%c0_29, %c0_30, %c0_31] : memref<1x1x32xf32, #tpu.memory_space<vmem>>, vector<1x1x32xf32>
      tpu.vector_store %arg5[%c0_29, %c0_30, %c0_31], %42 {strides = array<i32>} : memref<1x1x32xf32, #tpu.memory_space<vmem>>, vector<1x1x32xf32>,
      %c0_32 = arith.constant 0 : index
      %c0_33 = arith.constant 0 : index
      %44 = vector.load %arg9[%c0_32, %c0_33] : memref<1x32xf32, #tpu.memory_space<vmem>>, vector<1x32xf32>
      %45 = vector.shape_cast %44 : vector<1x32xf32> to vector<1x1x32xf32>
      %c0_34 = arith.constant 0 : index
      %c0_35 = arith.constant 0 : index
      %c0_36 = arith.constant 0 : index
      %46 = vector.load %arg6[%c0_34, %c0_35, %c0_36] : memref<1x1x32xf32, #tpu.memory_space<vmem>>, vector<1x1x32xf32>
      tpu.vector_store %arg6[%c0_34, %c0_35, %c0_36], %45 {strides = array<i32>} : memref<1x1x32xf32, #tpu.memory_space<vmem>>, vector<1x1x32xf32>,
    } else {
    }
    return
  }
  func.func @transform_0(%arg0: i32, %arg1: i32) -> (i32, i32) {
    %c1_i32 = arith.constant 1 : i32
    %0 = arith.muli %arg0, %c1_i32 : i32
    %1 = arith.addi %0, %arg1 : i32
    %c0_i32 = arith.constant 0 : i32
    %c0_i32_0 = arith.constant 0 : i32
    return %1, %c0_i32 : i32, i32
  }
  func.func @transform_1(%arg0: i32, %arg1: i32) -> (i32, i32) {
    %c1_i32 = arith.constant 1 : i32
    %0 = arith.muli %arg0, %c1_i32 : i32
    %1 = arith.addi %0, %arg1 : i32
    %c0_i32 = arith.constant 0 : i32
    %c0_i32_0 = arith.constant 0 : i32
    return %1, %c0_i32 : i32, i32
  }
  func.func @transform_2(%arg0: i32, %arg1: i32) -> (i32, i32, i32) {
    %c0_i32 = arith.constant 0 : i32
    %c0_i32_0 = arith.constant 0 : i32
    %c0_i32_1 = arith.constant 0 : i32
    return %arg0, %c0_i32, %c0_i32_0 : i32, i32, i32
  }
  func.func @transform_3(%arg0: i32, %arg1: i32) -> (i32, i32, i32) {
    %c0_i32 = arith.constant 0 : i32
    %c0_i32_0 = arith.constant 0 : i32
    %c0_i32_1 = arith.constant 0 : i32
    return %arg0, %c0_i32, %c0_i32_0 : i32, i32, i32
  }
  func.func @transform_4(%arg0: i32, %arg1: i32) -> (i32, i32, i32) {
    %c0_i32 = arith.constant 0 : i32
    %c0_i32_0 = arith.constant 0 : i32
    %c0_i32_1 = arith.constant 0 : i32
    return %arg0, %c0_i32, %c0_i32_0 : i32, i32, i32
  }
}

</mosaic_0001>

<llo_original>
// kernel: tpu_custom_call.1
$region0: #{tpu_custom_call.1}
  #allocation0 [shape = 'u32[]', space=smem, size = 0x4, offset = 0x4, fixed_abs, tag = 'smem constant byte address 0x4 - core index']
  #allocation1 [shape = 'u32[144,128]{1,0:T(1,128)}', space=vmem, size = 0x12000, scoped, tag = 'internal scratch']
  #allocation2 [shape = 'f32[1,32]{1,0:T(1,128)}', space=vmem, size = 0x200, scoped, tag = 'scratch operand']
  #allocation3 [shape = 'f32[1,32]{1,0:T(1,128)}', space=vmem, size = 0x200, scoped, tag = 'scratch operand']
  #allocation4 [shape = 'f32[1,32]{1,0:T(1,128)}', space=vmem, size = 0x200, scoped, tag = 'scratch operand']
  %s0 = inlined_call_operand.vmem [shape: f32[72,32], index: 0, kind: input, shape index: {}]
  %s1 = inlined_call_operand.vmem [shape: s32[72,1], index: 1, kind: input, shape index: {}]
  %s2 = inlined_call_operand.hbm [shape: f32[1,1,32], index: 2, kind: output, shape index: {0}]
  %s3 = inlined_call_operand.hbm [shape: f32[1,1,32], index: 3, kind: output, shape index: {1}]
  %s4 = inlined_call_operand.hbm [shape: f32[1,1,32], index: 4, kind: output, shape index: {2}]
  %5 = xla_tuple %s2, %s3, %s4
  %s6 = sld [smem:[#allocation0]]
  $region42: #{tpu_custom_call.1} parent=0
    _
  %s8 = ssub.s32 1, %s6
  %s9 = scalar_select 0, %s8, %s6
  $region1: #{tpu_custom_call.1} parent=0
    #allocation5 [shape = 'u8[512]{0}', space=vmem, size = 0x400, scoped, tag = 'output window, operand 0, single buffered']
    #allocation6 [shape = 's32[1]{0}', space=sflag, size = 0x4, scoped, tag = 'scoped memory for tpu_custom_call.1']
    #allocation7 [shape = 'u8[512]{0}', space=vmem, size = 0x400, scoped, tag = 'output window, operand 1, single buffered']
    #allocation8 [shape = 's32[1]{0}', space=sflag, size = 0x4, scoped, tag = 'scoped memory for tpu_custom_call.1']
    #allocation9 [shape = 'u8[512]{0}', space=vmem, size = 0x400, scoped, tag = 'output window, operand 2, single buffered']
    %10 = vsyncpa [#allocation6], 0
    %11 = vsyncpa [#allocation8], 0
    // Predicated region
    $region2: #{tpu_custom_call.1} parent=1 // pred_check
      _
    $region3: #{tpu_custom_call.1} parent=1 // pred_check_branch
      %13 = sbr.rel (0) target = $region5
    $region4: #{tpu_custom_call.1} parent=1 // pred_region
      %s14 = sadd.s32 0, 0
      %s15 = smul.u32 9, %s14
      %p16 = scmp.lt.s32.totalorder %s15, 8
      %s17 = scalar_select %p16, %s15, 8
      %s18 = smul.addr %s17, 8
      %s19 = scalar_lea.vmem %s0, %s18
      %s20 = sadd.s32 0, 0
      %s21 = smul.u32 9, %s20
    $region5: #{tpu_custom_call.1} parent=1 // pred_fallthru
      _
    // Predicated region
    $region6: #{tpu_custom_call.1} parent=1 // pred_check
      _
    $region7: #{tpu_custom_call.1} parent=1 // pred_check_branch
      %23 = sbr.rel (0) target = $region9
    $region8: #{tpu_custom_call.1} parent=1 // pred_region
      %s24 = sadd.s32 0, 0
      %s25 = smul.u32 9, %s24
      %p26 = scmp.lt.s32.totalorder %s25, 8
      %s27 = scalar_select %p26, %s25, 8
      %s28 = smul.addr %s27, 8
      %s29 = scalar_lea.vmem %s1, %s28
      %s30 = sadd.s32 0, 0
      %s31 = smul.u32 9, %s30
    $region9: #{tpu_custom_call.1} parent=1 // pred_fallthru
      _
    %s32 = sadd.s32 0, 0
    %s33 = smul.u32 9, %s32
    %p34 = scmp.lt.s32.totalorder %s33, 8
    %s35 = scalar_select %p34, %s33, 8
    %s36 = smul.addr %s35, 8
    %s37 = scalar_lea.vmem %s0, %s36
    %s38 = sadd.s32 0, 0
    %s39 = smul.u32 9, %s38
    %p40 = scmp.lt.s32.totalorder %s39, 8
    %s41 = scalar_select %p40, %s39, 8
    %s42 = smul.addr %s41, 8
    %s43 = scalar_lea.vmem %s1, %s42
    %s44 = sadd.s32 0, 0
    %s45 = smul.u32 9, %s44
    %p46 = scmp.lt.s32.totalorder %s45, 8
    %s47 = scalar_select %p46, %s45, 8
    %s48 = smul.addr %s47, 8
    %s49 = scalar_lea.vmem %s0, %s48
    %s50 = sadd.s32 0, 0
    %s51 = smul.u32 9, %s50
    %s52 = sadd.s32 0, 0
    %s53 = smul.u32 9, %s52
    %p54 = scmp.lt.s32.totalorder %s53, 8
    %s55 = scalar_select %p54, %s53, 8
    %s56 = smul.addr %s55, 8
    %s57 = scalar_lea.vmem %s1, %s56
    %s58 = sadd.s32 0, 0
    %s59 = smul.u32 9, %s58
    %p60 = scmp.eq.s32.totalorder 0, 0
    // Predicated region
    $region10: #{tpu_custom_call.1} parent=1 // pred_check
      %p61 = pneg %p60
    $region11: #{tpu_custom_call.1} parent=1 // pred_check_branch
      %63 = sbr.rel (%p61) target = $region13
    $region12: #{tpu_custom_call.1} parent=1 // pred_region
      %vm64 = vcmask 253952
      %65 = vst.msk [vmem:[#allocation2] sm:$0x1] %vm64, 0.0
      %66 = vst.msk [vmem:[#allocation3] sm:$0x1] %vm64, 0.0
      %67 = vst.msk [vmem:[#allocation4] sm:$0x1] %vm64, 0.0
    $region13: #{tpu_custom_call.1} parent=1 // pred_fallthru
      _
    %v68 = vld [vmem:[%s49] sm:$0xff]
    %v69 = vld [vmem:[%s49 + $0x8] sm:$0xff]
    %v70 = vld [vmem:[%s49 + $0x10] sm:$0xff]
    %v71 = vld [vmem:[%s49 + $0x18] sm:$0xff]
    %v72 = vld [vmem:[%s49 + $0x20] sm:$0xff]
    %v73 = vld [vmem:[%s49 + $0x28] sm:$0xff]
    %v74 = vld [vmem:[%s49 + $0x30] sm:$0xff]
    %v75 = vld [vmem:[%s49 + $0x38] sm:$0xff]
    %v76 = vld [vmem:[%s49 + $0x40] sm:$0xff]
    %v77 = vlaneseq
    %v78 = vand.u32 %v77, 127
    %v79 = vld [vmem:[%s57] sm:$0xff]
    %v80 = vld [vmem:[%s57 + $0x8] sm:$0xff]
    %v81 = vld [vmem:[%s57 + $0x10] sm:$0xff]
    %v82 = vld [vmem:[%s57 + $0x18] sm:$0xff]
    %v83 = vld [vmem:[%s57 + $0x20] sm:$0xff]
    %v84 = vld [vmem:[%s57 + $0x28] sm:$0xff]
    %v85 = vld [vmem:[%s57 + $0x30] sm:$0xff]
    %v86 = vld [vmem:[%s57 + $0x38] sm:$0xff]
    %v87 = vld [vmem:[%s57 + $0x40] sm:$0xff]
    %88 = vset.pattern.permute.xlu0 0
    %89 = vperm.xlu0 %88, %v79
    %v90 = vpop.permute.xlu0 %89
    %91 = vset.pattern.permute.xlu0 0
    %92 = vperm.xlu0 %91, %v80
    %v93 = vpop.permute.xlu0 %92
    %94 = vset.pattern.permute.xlu0 0
    %95 = vperm.xlu0 %94, %v81
    %v96 = vpop.permute.xlu0 %95
    %97 = vset.pattern.permute.xlu0 0
    %98 = vperm.xlu0 %97, %v82
    %v99 = vpop.permute.xlu0 %98
    %100 = vset.pattern.permute.xlu0 0
    %101 = vperm.xlu0 %100, %v83
    %v102 = vpop.permute.xlu0 %101
    %103 = vset.pattern.permute.xlu0 0
    %104 = vperm.xlu0 %103, %v84
    %v105 = vpop.permute.xlu0 %104
    %106 = vset.pattern.permute.xlu0 0
    %107 = vperm.xlu0 %106, %v85
    %v108 = vpop.permute.xlu0 %107
    %109 = vset.pattern.permute.xlu0 0
    %110 = vperm.xlu0 %109, %v86
    %v111 = vpop.permute.xlu0 %110
    %112 = vset.pattern.permute.xlu0 0
    %113 = vperm.xlu0 %112, %v87
    %v114 = vpop.permute.xlu0 %113
    %vm115 = vcmp.eq.s32.totalorder %v78, %v90
    %vm116 = vcmp.eq.s32.totalorder %v78, %v93
    %vm117 = vcmp.eq.s32.totalorder %v78, %v96
    %vm118 = vcmp.eq.s32.totalorder %v78, %v99
    %vm119 = vcmp.eq.s32.totalorder %v78, %v102
    %vm120 = vcmp.eq.s32.totalorder %v78, %v105
    %vm121 = vcmp.eq.s32.totalorder %v78, %v108
    %vm122 = vcmp.eq.s32.totalorder %v78, %v111
    %vm123 = vcmp.eq.s32.totalorder %v78, %v114
    %v124 = vsel %vm115, 1, 0
    %v125 = vsel %vm116, 1, 0
    %v126 = vsel %vm117, 1, 0
    %v127 = vsel %vm118, 1, 0
    %v128 = vsel %vm119, 1, 0
    %v129 = vsel %vm120, 1, 0
    %v130 = vsel %vm121, 1, 0
    %v131 = vsel %vm122, 1, 0
    %v132 = vsel %vm123, 1, 0
    %v133 = vcvt.s32.f32 %v124
    %v134 = vcvt.s32.f32 %v125
    %v135 = vcvt.s32.f32 %v126
    %v136 = vcvt.s32.f32 %v127
    %v137 = vcvt.s32.f32 %v128
    %v138 = vcvt.s32.f32 %v129
    %v139 = vcvt.s32.f32 %v130
    %v140 = vcvt.s32.f32 %v131
    %v141 = vcvt.s32.f32 %v132
    %vm142 = vcmask 261120
    %v143 = vsel %vm142, %v68, -inf
    %144 = vmax.xlane.f32.xlu0 %v143
    %v145 = vpop.xlane.xlu0 %144
    %v146 = vsel %vm142, %v69, -inf
    %147 = vmax.xlane.f32.xlu0 %v146
    %v148 = vpop.xlane.xlu0 %147
    %v149 = vsel %vm142, %v70, -inf
    %150 = vmax.xlane.f32.xlu0 %v149
    %v151 = vpop.xlane.xlu0 %150
    %v152 = vsel %vm142, %v71, -inf
    %153 = vmax.xlane.f32.xlu0 %v152
    %v154 = vpop.xlane.xlu0 %153
    %v155 = vsel %vm142, %v72, -inf
    %156 = vmax.xlane.f32.xlu0 %v155
    %v157 = vpop.xlane.xlu0 %156
    %v158 = vsel %vm142, %v73, -inf
    %159 = vmax.xlane.f32.xlu0 %v158
    %v160 = vpop.xlane.xlu0 %159
    %v161 = vsel %vm142, %v74, -inf
    %162 = vmax.xlane.f32.xlu0 %v161
    %v163 = vpop.xlane.xlu0 %162
    %v164 = vsel %vm142, %v75, -inf
    %165 = vmax.xlane.f32.xlu0 %v164
    %v166 = vpop.xlane.xlu0 %165
    %v167 = vsel %vm142, %v76, -inf
    %168 = vmax.xlane.f32.xlu0 %v167
    %v169 = vpop.xlane.xlu0 %168
    %v170 = vsub.f32 %v68, %v145
    %v171 = vsub.f32 %v69, %v148
    %v172 = vsub.f32 %v70, %v151
    %v173 = vsub.f32 %v71, %v154
    %v174 = vsub.f32 %v72, %v157
    %v175 = vsub.f32 %v73, %v160
    %v176 = vsub.f32 %v74, %v163
    %v177 = vsub.f32 %v75, %v166
    %v178 = vsub.f32 %v76, %v169
    %v179 = vmul.f32 %v170, 1.442695
    %v180 = vpow.pop %v179
    %v181 = vmul.f32 %v171, 1.442695
    %v182 = vpow.pop %v181
    %v183 = vmul.f32 %v172, 1.442695
    %v184 = vpow.pop %v183
    %v185 = vmul.f32 %v173, 1.442695
    %v186 = vpow.pop %v185
    %v187 = vmul.f32 %v174, 1.442695
    %v188 = vpow.pop %v187
    %v189 = vmul.f32 %v175, 1.442695
    %v190 = vpow.pop %v189
    %v191 = vmul.f32 %v176, 1.442695
    %v192 = vpow.pop %v191
    %v193 = vmul.f32 %v177, 1.442695
    %v194 = vpow.pop %v193
    %v195 = vmul.f32 %v178, 1.442695
    %v196 = vpow.pop %v195
    %v197 = vsel %vm142, %v180, 0.0
    %198 = vadd.xlane.f32.xlu0 %v197
    %v199 = vpop.xlane.xlu0 %198
    %v200 = vsel %vm142, %v182, 0.0
    %201 = vadd.xlane.f32.xlu0 %v200
    %v202 = vpop.xlane.xlu0 %201
    %v203 = vsel %vm142, %v184, 0.0
    %204 = vadd.xlane.f32.xlu0 %v203
    %v205 = vpop.xlane.xlu0 %204
    %v206 = vsel %vm142, %v186, 0.0
    %207 = vadd.xlane.f32.xlu0 %v206
    %v208 = vpop.xlane.xlu0 %207
    %v209 = vsel %vm142, %v188, 0.0
    %210 = vadd.xlane.f32.xlu0 %v209
    %v211 = vpop.xlane.xlu0 %210
    %v212 = vsel %vm142, %v190, 0.0
    %213 = vadd.xlane.f32.xlu0 %v212
    %v214 = vpop.xlane.xlu0 %213
    %v215 = vsel %vm142, %v192, 0.0
    %216 = vadd.xlane.f32.xlu0 %v215
    %v217 = vpop.xlane.xlu0 %216
    %v218 = vsel %vm142, %v194, 0.0
    %219 = vadd.xlane.f32.xlu0 %v218
    %v220 = vpop.xlane.xlu0 %219
    %v221 = vsel %vm142, %v196, 0.0
    %222 = vadd.xlane.f32.xlu0 %v221
    %v223 = vpop.xlane.xlu0 %222
    %v224 = vrcp.pop %v199
    %v225 = vmul.f32 %v180, %v224
    %v226 = vrcp.pop %v202
    %v227 = vmul.f32 %v182, %v226
    %v228 = vrcp.pop %v205
    %v229 = vmul.f32 %v184, %v228
    %v230 = vrcp.pop %v208
    %v231 = vmul.f32 %v186, %v230
    %v232 = vrcp.pop %v211
    %v233 = vmul.f32 %v188, %v232
    %v234 = vrcp.pop %v214
    %v235 = vmul.f32 %v190, %v234
    %v236 = vrcp.pop %v217
    %v237 = vmul.f32 %v192, %v236
    %v238 = vrcp.pop %v220
    %v239 = vmul.f32 %v194, %v238
    %v240 = vrcp.pop %v223
    %v241 = vmul.f32 %v196, %v240
    %v242 = vld [vmem:[#allocation2] sm:$0x1]
    %v243 = vmul.f32 %v133, %v225
    %v244 = vmul.f32 %v134, %v227
    %v245 = vmul.f32 %v135, %v229
    %v246 = vmul.f32 %v136, %v231
    %v247 = vmul.f32 %v137, %v233
    %v248 = vmul.f32 %v138, %v235
    %v249 = vmul.f32 %v139, %v237
    %v250 = vmul.f32 %v140, %v239
    %v251 = vmul.f32 %v141, %v241
    %v252 = vsel %vm142, %v243, 0.0
    %v253 = vsel %vm142, %v244, 0.0
    %v254 = vadd.f32 %v252, %v253
    %v255 = vsel %vm142, %v245, 0.0
    %v256 = vadd.f32 %v254, %v255
    %v257 = vsel %vm142, %v246, 0.0
    %v258 = vadd.f32 %v256, %v257
    %v259 = vsel %vm142, %v247, 0.0
    %v260 = vadd.f32 %v258, %v259
    %v261 = vsel %vm142, %v248, 0.0
    %v262 = vadd.f32 %v260, %v261
    %v263 = vsel %vm142, %v249, 0.0
    %v264 = vadd.f32 %v262, %v263
    %v265 = vsel %vm142, %v250, 0.0
    %v266 = vadd.f32 %v264, %v265
    %v267 = vsel %vm142, %v251, 0.0
    %v268 = vadd.f32 %v266, %v267
    %v269 = vrot.slane %v268, 4
    %v270 = vadd.f32 %v268, %v269
    %v271 = vrot.slane %v270, 2
    %v272 = vadd.f32 %v270, %v271
    %v273 = vrot.slane %v272, 1
    %v274 = vadd.f32 %v272, %v273
    %v275 = vadd.f32 %v242, %v274
    %vm276 = vcmask 253952
    %277 = vst.msk [vmem:[#allocation2] sm:$0x1] %vm276, %v275
    %v278 = vld [vmem:[#allocation3] sm:$0x1]
    %v279 = vsel %vm142, %v225, 0.0
    %v280 = vsel %vm142, %v227, 0.0
    %v281 = vadd.f32 %v279, %v280
    %v282 = vsel %vm142, %v229, 0.0
    %v283 = vadd.f32 %v281, %v282
    %v284 = vsel %vm142, %v231, 0.0
    %v285 = vadd.f32 %v283, %v284
    %v286 = vsel %vm142, %v233, 0.0
    %v287 = vadd.f32 %v285, %v286
    %v288 = vsel %vm142, %v235, 0.0
    %v289 = vadd.f32 %v287, %v288
    %v290 = vsel %vm142, %v237, 0.0
    %v291 = vadd.f32 %v289, %v290
    %v292 = vsel %vm142, %v239, 0.0
    %v293 = vadd.f32 %v291, %v292
    %v294 = vsel %vm142, %v241, 0.0
    %v295 = vadd.f32 %v293, %v294
    %v296 = vrot.slane %v295, 4
    %v297 = vadd.f32 %v295, %v296
    %v298 = vrot.slane %v297, 2
    %v299 = vadd.f32 %v297, %v298
    %v300 = vrot.slane %v299, 1
    %v301 = vadd.f32 %v299, %v300
    %v302 = vadd.f32 %v278, %v301
    %303 = vst.msk [vmem:[#allocation3] sm:$0x1] %vm276, %v302
    %v304 = vld [vmem:[#allocation4] sm:$0x1]
    %v305 = vsel %vm142, %v133, 0.0
    %v306 = vsel %vm142, %v134, 0.0
    %v307 = vadd.f32 %v305, %v306
    %v308 = vsel %vm142, %v135, 0.0
    %v309 = vadd.f32 %v307, %v308
    %v310 = vsel %vm142, %v136, 0.0
    %v311 = vadd.f32 %v309, %v310
    %v312 = vsel %vm142, %v137, 0.0
    %v313 = vadd.f32 %v311, %v312
    %v314 = vsel %vm142, %v138, 0.0
    %v315 = vadd.f32 %v313, %v314
    %v316 = vsel %vm142, %v139, 0.0
    %v317 = vadd.f32 %v315, %v316
    %v318 = vsel %vm142, %v140, 0.0
    %v319 = vadd.f32 %v317, %v318
    %v320 = vsel %vm142, %v141, 0.0
    %v321 = vadd.f32 %v319, %v320
    %v322 = vrot.slane %v321, 4
    %v323 = vadd.f32 %v321, %v322
    %v324 = vrot.slane %v323, 2
    %v325 = vadd.f32 %v323, %v324
    %v326 = vrot.slane %v325, 1
    %v327 = vadd.f32 %v325, %v326
    %v328 = vadd.f32 %v304, %v327
    %329 = vst.msk [vmem:[#allocation4] sm:$0x1] %vm276, %v328
    // Predicated region
    $region14: #{tpu_custom_call.1} parent=1 // pred_check
      %p330 = pneg %p60
    $region15: #{tpu_custom_call.1} parent=1 // pred_check_branch
      %332 = sbr.rel (%p330) target = $region17
    $region16: #{tpu_custom_call.1} parent=1 // pred_region
      %v333 = vld [vmem:[#allocation2] sm:$0x1]
      %334 = vst.msk [vmem:[#allocation5] sm:$0x1] %vm276, %v333
      %v335 = vld [vmem:[#allocation3] sm:$0x1]
      %336 = vst.msk [vmem:[#allocation7] sm:$0x1] %vm276, %v335
      %v337 = vld [vmem:[#allocation4] sm:$0x1]
      %338 = vst.msk [vmem:[#allocation9] sm:$0x1] %vm276, %v337
    $region17: #{tpu_custom_call.1} parent=1 // pred_fallthru
      _
    // Predicated region
    $region18: #{tpu_custom_call.1} parent=1 // pred_check
      _
    $region19: #{tpu_custom_call.1} parent=1 // pred_check_branch
      %340 = sbr.rel (0) target = $region21
    $region20: #{tpu_custom_call.1} parent=1 // pred_region
      %s342 = ssub.s32 16, 16
      %343 = vsyncadd [#allocation6], %s342
      %s345 = sshll.u32 [#allocation5], 4
      %s346 = int_to_ptr.vmem [resolvable:$true] %s345
      %348 = dma.vmem_to_hbm [thread:$0]  %s346, 16, %s2, [#allocation6]
    $region21: #{tpu_custom_call.1} parent=1 // pred_fallthru
      _
    // Predicated region
    $region22: #{tpu_custom_call.1} parent=1 // pred_check
      _
    $region23: #{tpu_custom_call.1} parent=1 // pred_check_branch
      %350 = sbr.rel (0) target = $region25
    $region24: #{tpu_custom_call.1} parent=1 // pred_region
      %s352 = ssub.s32 16, 16
      %353 = vsyncadd [#allocation8], %s352
      %s355 = sshll.u32 [#allocation7], 4
      %s356 = int_to_ptr.vmem [resolvable:$true] %s355
      %358 = dma.vmem_to_hbm [thread:$0]  %s356, 16, %s3, [#allocation8]
    $region25: #{tpu_custom_call.1} parent=1 // pred_fallthru
      _
    // Predicated region
    $region26: #{tpu_custom_call.1} parent=1 // pred_check
      _
    $region27: #{tpu_custom_call.1} parent=1 // pred_check_branch
      %360 = sbr.rel (0) target = $region29
    $region28: #{tpu_custom_call.1} parent=1 // pred_region
      %s362 = ssub.s32 16, 16
      %363 = vsyncadd [#allocation8], %s362
      %s365 = sshll.u32 [#allocation9], 4
      %s366 = int_to_ptr.vmem [resolvable:$true] %s365
      %368 = dma.vmem_to_hbm [thread:$0]  %s366, 16, %s4, [#allocation8]
    $region29: #{tpu_custom_call.1} parent=1 // pred_fallthru
      _
    // Predicated region
    $region30: #{tpu_custom_call.1} parent=1 // pred_check
      _
    $region31: #{tpu_custom_call.1} parent=1 // pred_check_branch
      %370 = sbr.rel (0) target = $region33
    $region32: #{tpu_custom_call.1} parent=1 // pred_region
      %371 = dma.done [#allocation6], 16
    $region33: #{tpu_custom_call.1} parent=1 // pred_fallthru
      _
    // Predicated region
    $region34: #{tpu_custom_call.1} parent=1 // pred_check
      _
    $region35: #{tpu_custom_call.1} parent=1 // pred_check_branch
      %373 = sbr.rel (0) target = $region37
    $region36: #{tpu_custom_call.1} parent=1 // pred_region
      %374 = dma.done [#allocation8], 16
    $region37: #{tpu_custom_call.1} parent=1 // pred_fallthru
      _
    // Predicated region
    $region38: #{tpu_custom_call.1} parent=1 // pred_check
      _
    $region39: #{tpu_custom_call.1} parent=1 // pred_check_branch
      %376 = sbr.rel (0) target = $region41
    $region40: #{tpu_custom_call.1} parent=1 // pred_region
      %377 = dma.done [#allocation8], 16
    $region41: #{tpu_custom_call.1} parent=1 // pred_fallthru
      _
    %378 = vsyncpa [#allocation6], 1
    %379 = vsyncpa [#allocation8], 1

</llo_original>
